<compile_context>
chip_gen: v5e
topology: v5e:2x2
jax: 0.10.0
libtpu: 0.0.40
codegen_flags: <defaults>
</compile_context>

<pallas_src>
import functools
import math

import jax
import jax.numpy as jnp
from jax.experimental import pallas as pl
from jax.experimental.pallas import tpu as pltpu


def _round_up(x, m):
    return (x + m - 1) // m * m


def _pow_fast(w, gamma):
    """Integer-gamma fast path (repeated VPU multiplies); else jnp.power."""
    g = float(gamma)
    if g.is_integer() and 0 <= g <= 8:
        gi = int(g)
        if gi == 0:
            return jnp.ones_like(w)
        out = w
        for _ in range(gi - 1):
            out = out * w
        return out
    return jnp.power(w, g)


def _focal_loss_partial_kernel(pred_ref, target_ref, out_ref,
                               *, alpha, gamma, n_valid, tm, lanes, needs_mask):
    x = pred_ref[...].astype(jnp.float32)
    t = target_ref[...].astype(jnp.float32)

    # Shared exp(-|x|) feeds both the sigmoid and the stable BCE.
    e = jnp.exp(-jnp.abs(x))
    p = jnp.where(x >= 0.0, 1.0, e) / (1.0 + e)          # exact sigmoid(x)

    is_one = t == 1.0
    alpha_factor = jnp.where(is_one, 1.0 - alpha, alpha)
    focal_weight = jnp.where(is_one, 1.0 - p, p)
    fw_pow = _pow_fast(focal_weight, gamma)

    # -(t*log(p) + (1-t)*log(1-p)) == max(x,0) - x*t + log1p(exp(-|x|))
    bce = jnp.maximum(x, 0.0) - x * t + jnp.log1p(e)
    loss = alpha_factor * fw_pow * bce

    def _store(l):
        # (tm, lanes) -> (tm//8, 8, lanes) sublane-group reduction: aligned (8, lanes) store.
        out_ref[...] = jnp.sum(l.reshape(tm // 8, 8, lanes), axis=0)

    if needs_mask:
        i = pl.program_id(0)
        last = pl.num_programs(0) - 1

        @pl.when(i < last)
        def _():
            _store(loss)

        @pl.when(i == last)
        def _():
            # Padding is always confined to the last block (tail of the flat stream).
            row = jax.lax.broadcasted_iota(jnp.int32, (tm, lanes), 0) + i * tm
            col = jax.lax.broadcasted_iota(jnp.int32, (tm, lanes), 1)
            lin = row * lanes + col
            valid = (lin < n_valid).astype(jnp.float32)
            _store(loss * valid)
    else:
        _store(loss)


_ROW_CAP = 1024  # rows per block; with lanes=512 -> 2 MiB per f32 input tile


def _choose_tiling(n):
    # Lane width: a multiple of 128 that divides n exactly when possible (no padding).
    for cand in (512, 256, 128):
        if n % cand == 0:
            lanes = cand
            break
    else:
        lanes = min(512, _round_up(n, 128))
    rows = pl.cdiv(n, lanes)

    # Rows per block: as large as possible while bounding padding waste
    # to at most max(8, rows // 8) junk rows (~12.5% worst case).
    tm = min(_ROW_CAP, _round_up(rows, 8))
    while tm > 8 and (-rows) % tm > max(8, rows // 8):
        tm //= 2
    rows_pad = _round_up(rows, tm)

    # v7x megacore: split a single-block grid into 2 blocks when it costs nothing.
    if rows_pad // tm == 1 and rows_pad >= 16 and rows_pad % 16 == 0:
        tm //= 2
    return lanes, rows, tm, rows_pad


def focal_loss(pred, target, alpha=0.25, gamma=2):
    """pred, target: (batch, seq_len*seq_len) (any shape works). Scalar mean focal loss."""
    assert pred.shape == target.shape
    n = math.prod(pred.shape)

    lanes, rows, tm, rows_pad = _choose_tiling(n)
    n_pad = rows_pad * lanes
    num_blocks = rows_pad // tm
    needs_mask = n_pad != n

    pred_f = pred.reshape(-1)
    targ_f = target.reshape(-1)
    if needs_mask:
        # Only triggered when n is not a multiple of lanes or rows of tm;
        # padding is bounded small by _choose_tiling.
        pred_f = jnp.pad(pred_f, (0, n_pad - n))
        targ_f = jnp.pad(targ_f, (0, n_pad - n))
    pred2 = pred_f.reshape(rows_pad, lanes)
    targ2 = targ_f.reshape(rows_pad, lanes)

    kernel = functools.partial(
        _focal_loss_partial_kernel,
        alpha=float(alpha), gamma=gamma, n_valid=n, tm=tm, lanes=lanes,
        needs_mask=needs_mask)

    in_bytes = n_pad * (jnp.dtype(pred.dtype).itemsize
                        + jnp.dtype(target.dtype).itemsize)
    out_bytes = num_blocks * 8 * lanes * 4
    cost = pl.CostEstimate(
        flops=14 * n_pad,
        transcendentals=2 * n_pad,            # exp(-|x|), log1p
        bytes_accessed=in_bytes + out_bytes,
    )

    partials = pl.pallas_call(
        kernel,
        out_shape=jax.ShapeDtypeStruct((num_blocks * 8, lanes), jnp.float32),
        grid_spec=pltpu.PrefetchScalarGridSpec(
            num_scalar_prefetch=0,
            grid=(num_blocks,),
            in_specs=[
                pl.BlockSpec((tm, lanes), lambda i: (i, 0)),
                pl.BlockSpec((tm, lanes), lambda i: (i, 0)),
            ],
            out_specs=pl.BlockSpec((8, lanes), lambda i: (i, 0)),
        ),
        compiler_params=pltpu.CompilerParams(
            dimension_semantics=("parallel",),
            vmem_limit_bytes=32 * 1024 * 1024),
        cost_estimate=cost,
    )(pred2, targ2)

    # Final tiny reduction + mean in plain JAX (second stage).
    return jnp.sum(partials) / n


def focal_loss_ref(pred, target, alpha=0.25, gamma=2):
    """Pure-JAX reference matching the PyTorch module semantics."""
    p = jax.nn.sigmoid(pred.astype(jnp.float32)).reshape(-1)
    t = target.astype(jnp.float32).reshape(-1)
    alpha_factor = jnp.where(t == 1.0, 1.0 - alpha, alpha)
    focal_weight = jnp.where(t == 1.0, 1.0 - p, p)
    final_weight = alpha_factor * focal_weight ** gamma
    loss = -(t * jnp.log(p) + (1.0 - t) * jnp.log(1.0 - p))
    return jnp.mean(final_weight * loss)


if __name__ == "__main__":
    key = jax.random.PRNGKey(0)
    k1, k2, k3, k4, k5, k6 = jax.random.split(key, 6)

    # Test 1: module-shaped toy input: batch=2, seq_len=8 -> (2, 64)
    B, S = 2, 8
    pred = jax.random.normal(k1, (B, S * S), dtype=jnp.float32)
    target = jax.random.bernoulli(k2, 0.3, (B, S * S)).astype(jnp.float32)
    loss = jax.block_until_ready(focal_loss(pred, target))
    ref = jax.block_until_ready(focal_loss_ref(pred, target))
    assert jnp.isfinite(loss), "non-finite loss"
    assert jnp.allclose(loss, ref, rtol=1e-5, atol=1e-6), (loss, ref)

    # Test 2: non-128-divisible size to exercise padding/last-block-mask path.
    B2, L2 = 3, 100
    pred2 = jax.random.normal(k3, (B2, L2), dtype=jnp.float32)
    target2 = jax.random.bernoulli(k4, 0.5, (B2, L2)).astype(jnp.float32)
    loss2 = jax.block_until_ready(focal_loss(pred2, target2))
    ref2 = jax.block_until_ready(focal_loss_ref(pred2, target2))
    assert jnp.isfinite(loss2), "non-finite loss (padded case)"
    assert jnp.allclose(loss2, ref2, rtol=1e-5, atol=1e-6), (loss2, ref2)

    # Test 3: lane-exact size (batch=4, seq_len=64) -> multi-block, no padding, no mask.
    B3, S3 = 4, 64
    pred3 = jax.random.normal(k5, (B3, S3 * S3), dtype=jnp.float32)
    target3 = jax.random.bernoulli(k6, 0.3, (B3, S3 * S3)).astype(jnp.float32)
    loss3 = jax.block_until_ready(focal_loss(pred3, target3))
    ref3 = jax.block_until_ready(focal_loss_ref(pred3, target3))
    assert jnp.isfinite(loss3), "non-finite loss (multi-block case)"
    assert jnp.allclose(loss3, ref3, rtol=1e-5, atol=1e-6), (loss3, ref3)

    print("KERNEL_OK")
</pallas_src>

<mosaic_0001>
module attributes {stable_mosaic.version = 11 : i64} {
  func.func @_focal_loss_partial_kernel(%arg0: i32, %arg1: memref<8x128xf32, #tpu.memory_space<vmem>>, %arg2: memref<8x128xf32, #tpu.memory_space<vmem>>, %arg3: memref<8x128xf32, #tpu.memory_space<vmem>>) attributes {dimension_semantics = [#tpu.dimension_semantics<parallel>], iteration_bounds = array<i64: 1>, scalar_prefetch = 0 : i64, scratch_operands = 0 : i64, tpu.core_type = #tpu.core_type<tc>, window_params = [{transform_indices = @transform_0, window_bounds = array<i64: 8, 128>}, {transform_indices = @transform_1, window_bounds = array<i64: 8, 128>}, {transform_indices = @transform_2, window_bounds = array<i64: 8, 128>}]} {
    %c0 = arith.constant 0 : index
    %c0_0 = arith.constant 0 : index
    %0 = vector.load %arg1[%c0, %c0_0] : memref<8x128xf32, #tpu.memory_space<vmem>>, vector<8x128xf32>
    %c0_1 = arith.constant 0 : index
    %c0_2 = arith.constant 0 : index
    %1 = vector.load %arg2[%c0_1, %c0_2] : memref<8x128xf32, #tpu.memory_space<vmem>>, vector<8x128xf32>
    %2 = math.absf %0 : vector<8x128xf32>
    %cst = arith.constant 0.000000e+00 : f32
    %3 = vector.broadcast %cst : f32 to vector<8x128xf32>
    %4 = arith.subf %3, %2 : vector<8x128xf32>
    %5 = math.exp %4 : vector<8x128xf32>
    %cst_3 = arith.constant 0.000000e+00 : f32
    %6 = vector.broadcast %cst_3 : f32 to vector<8x128xf32>
    %7 = arith.cmpf oge, %0, %6 : vector<8x128xf32>
    %cst_4 = arith.constant 1.000000e+00 : f32
    %8 = vector.broadcast %cst_4 : f32 to vector<8x128xf32>
    %9 = arith.select %7, %8, %5 : vector<8x128xi1>, vector<8x128xf32>
    %cst_5 = arith.constant 1.000000e+00 : f32
    %10 = vector.broadcast %cst_5 : f32 to vector<8x128xf32>
    %11 = arith.addf %10, %5 : vector<8x128xf32>
    %12 = arith.divf %9, %11 : vector<8x128xf32>
    %cst_6 = arith.constant 1.000000e+00 : f32
    %13 = vector.broadcast %cst_6 : f32 to vector<8x128xf32>
    %14 = arith.cmpf oeq, %1, %13 : vector<8x128xf32>
    %cst_7 = arith.constant 7.500000e-01 : f32
    %cst_8 = arith.constant 2.500000e-01 : f32
    %15 = vector.broadcast %cst_7 : f32 to vector<8x128xf32>
    %16 = vector.broadcast %cst_8 : f32 to vector<8x128xf32>
    %17 = arith.select %14, %15, %16 : vector<8x128xi1>, vector<8x128xf32>
    %cst_9 = arith.constant 1.000000e+00 : f32
    %18 = vector.broadcast %cst_9 : f32 to vector<8x128xf32>
    %19 = arith.subf %18, %12 : vector<8x128xf32>
    %20 = arith.select %14, %19, %12 : vector<8x128xi1>, vector<8x128xf32>
    %21 = arith.mulf %20, %20 : vector<8x128xf32>
    %cst_10 = arith.constant 0.000000e+00 : f32
    %22 = vector.broadcast %cst_10 : f32 to vector<8x128xf32>
    %23 = arith.maximumf %0, %22 : vector<8x128xf32>
    %24 = arith.mulf %0, %1 : vector<8x128xf32>
    %25 = arith.subf %23, %24 : vector<8x128xf32>
    %26 = math.log1p %5 : vector<8x128xf32>
    %27 = arith.addf %25, %26 : vector<8x128xf32>
    %28 = arith.mulf %17, %21 : vector<8x128xf32>
    %29 = arith.mulf %28, %27 : vector<8x128xf32>
    %c0_i32 = arith.constant 0 : i32
    %30 = arith.cmpi slt, %arg0, %c0_i32 : i32
    %31 = arith.extui %30 : i1 to i32
    %c0_i32_11 = arith.constant 0 : i32
    %32 = arith.cmpi ne, %31, %c0_i32_11 : i32
    scf.if %32 {
      %36 = vector.shape_cast %29 : vector<8x128xf32> to vector<1x8x128xf32>
      %cst_14 = arith.constant dense<0.000000e+00> : vector<8x128xf32>
      %37 = vector.multi_reduction <add>, %36, %cst_14 [0] : vector<1x8x128xf32> to vector<8x128xf32>
      %c0_15 = arith.constant 0 : index
      %c0_16 = arith.constant 0 : index
      %38 = vector.load %arg3[%c0_15, %c0_16] : memref<8x128xf32, #tpu.memory_space<vmem>>, vector<8x128xf32>
      tpu.vector_store %arg3[%c0_15, %c0_16], %37 {strides = array<i32>} : memref<8x128xf32, #tpu.memory_space<vmem>>, vector<8x128xf32>,
    } else {
    }
    %c0_i32_12 = arith.constant 0 : i32
    %33 = arith.cmpi eq, %arg0, %c0_i32_12 : i32
    %34 = arith.extui %33 : i1 to i32
    %c0_i32_13 = arith.constant 0 : i32
    %35 = arith.cmpi ne, %34, %c0_i32_13 : i32
    scf.if %35 {
      %36 = tpu.iota {dimensions = array<i32: 0>} : vector<8x128xi32>
      %c8_i32 = arith.constant 8 : i32
      %37 = arith.muli %arg0, %c8_i32 : i32
      %38 = vector.broadcast %37 : i32 to vector<8x128xi32>
      %39 = arith.addi %36, %38 : vector<8x128xi32>
      %40 = tpu.iota {dimensions = array<i32: 1>} : vector<8x128xi32>
      %c128_i32 = arith.constant 128 : i32
      %41 = vector.broadcast %c128_i32 : i32 to vector<8x128xi32>
      %42 = arith.muli %39, %41 : vector<8x128xi32>
      %43 = arith.addi %42, %40 : vector<8x128xi32>
      %c128_i32_14 = arith.constant 128 : i32
      %44 = vector.broadcast %c128_i32_14 : i32 to vector<8x128xi32>
      %45 = arith.cmpi slt, %43, %44 : vector<8x128xi32>
      %46 = arith.extui %45 : vector<8x128xi1> to vector<8x128xi32>
      %47 = arith.sitofp %46 : vector<8x128xi32> to vector<8x128xf32>
      %48 = arith.mulf %29, %47 : vector<8x128xf32>
      %49 = vector.shape_cast %48 : vector<8x128xf32> to vector<1x8x128xf32>
      %cst_15 = arith.constant dense<0.000000e+00> : vector<8x128xf32>
      %50 = vector.multi_reduction <add>, %49, %cst_15 [0] : vector<1x8x128xf32> to vector<8x128xf32>
      %c0_16 = arith.constant 0 : index
      %c0_17 = arith.constant 0 : index
      %51 = vector.load %arg3[%c0_16, %c0_17] : memref<8x128xf32, #tpu.memory_space<vmem>>, vector<8x128xf32>
      tpu.vector_store %arg3[%c0_16, %c0_17], %50 {strides = array<i32>} : memref<8x128xf32, #tpu.memory_space<vmem>>, vector<8x128xf32>,
    } else {
    }
    return
  }
  func.func @transform_0(%arg0: i32) -> (i32, i32) {
    %c0_i32 = arith.constant 0 : i32
    %c0_i32_0 = arith.constant 0 : i32
    return %arg0, %c0_i32 : i32, i32
  }
  func.func @transform_1(%arg0: i32) -> (i32, i32) {
    %c0_i32 = arith.constant 0 : i32
    %c0_i32_0 = arith.constant 0 : i32
    return %arg0, %c0_i32 : i32, i32
  }
  func.func @transform_2(%arg0: i32) -> (i32, i32) {
    %c0_i32 = arith.constant 0 : i32
    %c0_i32_0 = arith.constant 0 : i32
    return %arg0, %c0_i32 : i32, i32
  }
}

</mosaic_0001>

<llo_original>
// kernel: tpu_custom_call.1
$region0: #{tpu_custom_call.1}
  #allocation0 [shape = 'u32[]', space=smem, size = 0x4, offset = 0x4, fixed_abs, tag = 'smem constant byte address 0x4 - core index']
  #allocation1 [shape = 'u32[72,128]{1,0:T(1,128)}', space=vmem, size = 0x9000, scoped, tag = 'internal scratch']
  %s0 = inlined_call_operand.hbm [shape: f32[8,128], index: 0, kind: input, shape index: {}]
  %s1 = inlined_call_operand.hbm [shape: f32[8,128], index: 1, kind: input, shape index: {}]
  %s2 = inlined_call_operand.hbm [shape: f32[8,128], index: 2, kind: output, shape index: {}]
  %s3 = sld [smem:[#allocation0]]
  $region34: #{tpu_custom_call.1} parent=0
    _
  %s5 = ssub.s32 1, %s3
  %s6 = scalar_select 0, %s5, %s3
  $region1: #{tpu_custom_call.1} parent=0
    #allocation2 [shape = 'u8[4096]{0}', space=vmem, size = 0x1000, scoped, tag = 'input window, operand 0, single buffered']
    #allocation3 [shape = 's32[1]{0}', space=sflag, size = 0x4, scoped, tag = 'scoped memory for tpu_custom_call.1']
    #allocation4 [shape = 's32[1]{0}', space=sflag, size = 0x4, scoped, tag = 'scoped memory for tpu_custom_call.1']
    #allocation5 [shape = 'u8[4096]{0}', space=vmem, size = 0x1000, scoped, tag = 'input window, operand 1, single buffered']
    #allocation6 [shape = 's32[1]{0}', space=sflag, size = 0x4, scoped, tag = 'scoped memory for tpu_custom_call.1']
    #allocation7 [shape = 'u8[4096]{0}', space=vmem, size = 0x1000, scoped, tag = 'output window, operand 0, single buffered']
    %7 = vsyncpa [#allocation3], 0
    %8 = vsyncpa [#allocation6], 0
    %9 = vsyncpa [#allocation4], 0
    // Predicated region
    $region2: #{tpu_custom_call.1} parent=1 // pred_check
      _
    $region3: #{tpu_custom_call.1} parent=1 // pred_check_branch
      %11 = sbr.rel (0) target = $region5
    $region4: #{tpu_custom_call.1} parent=1 // pred_region
      %13 = vsyncadd [#allocation3], 0
      %s15 = sshll.u32 %s0, 4
      %s16 = int_to_ptr.hbm [resolvable:$true] %s15
      %s17 = sshll.u32 [#allocation2], 4
      %s18 = int_to_ptr.vmem [resolvable:$true] %s17
      %20 = dma.hbm_to_vmem [thread:$0]  %s16, 128, %s18, [#allocation3]
    $region5: #{tpu_custom_call.1} parent=1 // pred_fallthru
      _
    // Predicated region
    $region6: #{tpu_custom_call.1} parent=1 // pred_check
      _
    $region7: #{tpu_custom_call.1} parent=1 // pred_check_branch
      %22 = sbr.rel (0) target = $region9
    $region8: #{tpu_custom_call.1} parent=1 // pred_region
      %24 = vsyncadd [#allocation6], 0
      %s26 = sshll.u32 %s1, 4
      %s27 = int_to_ptr.hbm [resolvable:$true] %s26
      %s28 = sshll.u32 [#allocation5], 4
      %s29 = int_to_ptr.vmem [resolvable:$true] %s28
      %31 = dma.hbm_to_vmem [thread:$0]  %s27, 128, %s29, [#allocation6]
    $region9: #{tpu_custom_call.1} parent=1 // pred_fallthru
      _
    // Predicated region
    $region10: #{tpu_custom_call.1} parent=1 // pred_check
      _
    $region11: #{tpu_custom_call.1} parent=1 // pred_check_branch
      %33 = sbr.rel (0) target = $region13
    $region12: #{tpu_custom_call.1} parent=1 // pred_region
      %35 = dma.done [#allocation3], 128
    $region13: #{tpu_custom_call.1} parent=1 // pred_fallthru
      _
    // Predicated region
    $region14: #{tpu_custom_call.1} parent=1 // pred_check
      _
    $region15: #{tpu_custom_call.1} parent=1 // pred_check_branch
      %37 = sbr.rel (0) target = $region17
    $region16: #{tpu_custom_call.1} parent=1 // pred_region
      %39 = dma.done [#allocation6], 128
    $region17: #{tpu_custom_call.1} parent=1 // pred_fallthru
      _
    %v40 = vld [vmem:[#allocation2] sm:$0xff]
    %v41 = vld [vmem:[#allocation5] sm:$0xff]
    %v42 = vand.u32 2147483647, %v40
    %v43 = vsub.f32 0.0, %v42
    %v44 = vmul.f32 %v43, 1.442695
    %v45 = vpow.pop %v44
    %vm46 = vcmp.ge.f32.partialorder %v40, 0.0
    %v47 = vsel %vm46, 1.0, %v45
    %v48 = vadd.f32 %v45, 1.0
    %v49 = vrcp.pop %v48
    %v50 = vmul.f32 %v48, %v49
    %v51 = vsub.f32 1.0, %v50
    %v52 = vmul.f32 %v49, %v51
    %v53 = vadd.f32 %v49, %v52
    %vm54 = vweird.f32 %v48
    %vm55 = vweird.f32 %v49
    %vm56 = vmor %vm54, %vm55
    %v57 = vsel %vm56, %v49, %v53
    %v58 = vand.u32 2147483647, %v48
    %vm59 = vcmp.eq.f32.partialorder %v58, 8.507059e+37
    %v60 = vand.u32 %v48, 2147483648
    %v61 = vor.u32 1.1754944e-38, %v60
    %v62 = vsel %vm59, %v61, %v57
    %v63 = vmul.f32 %v47, %v62
    %vm64 = vcmp.eq.f32.partialorder %v41, 1.0
    %v65 = vsel %vm64, 0.75, 0.25
    %v66 = vsub.f32 1.0, %v63
    %v67 = vsel %vm64, %v66, %v63
    %v68 = vmul.f32 %v67, %v67
    %v69 = vmax.f32 %v40, 0.0
    %v70 = vmul.f32 %v40, %v41
    %v71 = vsub.f32 %v69, %v70
    %v72 = vadd.f32 %v45, 1.0
    %v73 = vlog2.pop %v72
    %v74 = vmul.f32 %v73, 0.6931472
    %v75 = vmul.f32 -0.5, %v45
    %v76 = vadd.f32 %v75, 1.0
    %v77 = vmul.f32 %v76, %v45
    %v78 = vand.u32 2147483647, %v45
    %vm79 = vcmp.lt.f32.partialorder %v78, 0.0004427343
    %v80 = vsel %vm79, %v77, %v74
    %v81 = vadd.f32 %v71, %v80
    %v82 = vmul.f32 %v65, %v68
    %v83 = vmul.f32 %v82, %v81
    %p84 = scmp.lt.s32.totalorder 0, 0
    // Predicated region
    $region18: #{tpu_custom_call.1} parent=1 // pred_check
      %p85 = pneg %p84
    $region19: #{tpu_custom_call.1} parent=1 // pred_check_branch
      %87 = sbr.rel (%p85) target = $region21
    $region20: #{tpu_custom_call.1} parent=1 // pred_region
      %v88 = vadd.f32 %v83, 0.0
      %89 = vst [vmem:[#allocation7] sm:$0xff] %v88
    $region21: #{tpu_custom_call.1} parent=1 // pred_fallthru
      _
    %p90 = scmp.eq.s32.totalorder 0, 0
    // Predicated region
    $region22: #{tpu_custom_call.1} parent=1 // pred_check
      %p91 = pneg %p90
    $region23: #{tpu_custom_call.1} parent=1 // pred_check_branch
      %93 = sbr.rel (%p91) target = $region25
    $region24: #{tpu_custom_call.1} parent=1 // pred_region
      %v94 = vlaneseq
      %v95 = vshrl.u32 %v94, 7
      %s96 = smul.u32 0, 8
      %v97 = vstv %s96
      %v98 = vadd.s32 %v95, %v97
      %v99 = vlaneseq
      %v100 = vand.u32 %v99, 127
      %v101 = vmul.u32 %v98, 128
      %v102 = vadd.s32 %v101, %v100
      %vm103 = vcmp.lt.s32.totalorder %v102, 128
      %v104 = vsel %vm103, 1, 0
      %v105 = vcvt.s32.f32 %v104
      %v106 = vmul.f32 %v83, %v105
      %v107 = vadd.f32 %v106, 0.0
      %108 = vst [vmem:[#allocation7] sm:$0xff] %v107
    $region25: #{tpu_custom_call.1} parent=1 // pred_fallthru
      _
    // Predicated region
    $region26: #{tpu_custom_call.1} parent=1 // pred_check
      _
    $region27: #{tpu_custom_call.1} parent=1 // pred_check_branch
      %110 = sbr.rel (0) target = $region29
    $region28: #{tpu_custom_call.1} parent=1 // pred_region
      %112 = vsyncadd [#allocation4], 0
      %s114 = sshll.u32 [#allocation7], 4
      %s115 = int_to_ptr.vmem [resolvable:$true] %s114
      %s116 = sshll.u32 %s2, 4
      %s117 = int_to_ptr.hbm [resolvable:$true] %s116
      %119 = dma.vmem_to_hbm [thread:$0]  %s115, 128, %s117, [#allocation4]
    $region29: #{tpu_custom_call.1} parent=1 // pred_fallthru
      _
    // Predicated region
    $region30: #{tpu_custom_call.1} parent=1 // pred_check
      _
    $region31: #{tpu_custom_call.1} parent=1 // pred_check_branch
      %121 = sbr.rel (0) target = $region33
    $region32: #{tpu_custom_call.1} parent=1 // pred_region
      %123 = dma.done [#allocation4], 128
    $region33: #{tpu_custom_call.1} parent=1 // pred_fallthru
      _
    %124 = vsyncpa [#allocation3], 1
    %125 = vsyncpa [#allocation6], 1
    %126 = vsyncpa [#allocation4], 1

</llo_original>
